<compile_context>
chip_gen: v5e
topology: v5e:2x2
jax: 0.10.0
libtpu: 0.0.40
codegen_flags: <defaults>
</compile_context>

<pallas_src>
import jax
import jax.numpy as jnp
from jax.experimental import pallas as pl
from jax.experimental.pallas import tpu as pltpu


def _round_up(a, b):
    return ((a + b - 1) // b) * b


def _depthwise_kernel(x_ref, w_ref, b_ref, o_ref):
    # x_ref/o_ref: (TM, C); w_ref/b_ref: (1, C). Pure VPU elementwise, mem-bound.
    o_ref[...] = (x_ref[...] * w_ref[...] + b_ref[...]).astype(o_ref.dtype)


def _grouped_matmul_kernel(x_ref, w_ref, b_ref, o_ref):
    # x_ref: (TM, Cin); w_ref: (Cin, Cout) block-diagonal dense; b_ref: (1, Cout).
    acc = jnp.dot(x_ref[...], w_ref[...], preferred_element_type=jnp.float32)
    o_ref[...] = (acc + b_ref[...].astype(jnp.float32)).astype(o_ref.dtype)


def depthwise_projection_forward(x, weight, bias, groups, *, block_rows=256):
    """Pallas implementation of depthwise_projection.forward.

    x:      (B, N, C_in) with N a perfect square (token grid).
    weight: (C_out, C_in // groups) -- the 1x1 conv weight with the (1,1) spatial
            dims squeezed out (PyTorch layout: weight[co, ci_in_group, 0, 0]).
    bias:   (C_out,)
    groups: conv group count.
    Returns (B, N, C_out).
    """
    B, N, c_in = x.shape
    c_out, c_in_g = weight.shape
    assert c_in % groups == 0 and c_out % groups == 0
    assert c_in_g == c_in // groups
    p = int(round(N ** 0.5))
    assert p * p == N, "depthwise_projection expects a square token grid"
    # The (B, N, C) -> (B, C, P, P) -> (B, N, C) rearranges are layout-only for a
    # 1x1 conv, so we compute directly on the flattened token axis.

    m = B * N
    x2 = x.reshape(m, c_in)

    # Row tile: multiple of 8 (sublane), as big as block_rows allows.
    tm = min(_round_up(block_rows, 8), _round_up(m, 8))
    mp = _round_up(m, tm)
    if mp != m:
        x2 = jnp.pad(x2, ((0, mp - m), (0, 0)))

    grid = (mp // tm,)
    bias2 = bias.reshape(1, c_out)

    depthwise = (groups == c_in) and (c_out == c_in)
    if depthwise:
        # Canonical DCA usage: per-channel scale + bias -> elementwise VPU kernel.
        w2 = weight.reshape(1, c_in)
        kernel = _depthwise_kernel
        flops = 2 * m * c_in
    else:
        # General grouped projection: build the block-diagonal dense (Cin, Cout)
        # weight once at trace time; the kernel is then a plain MXU matmul.
        c_og = c_out // groups
        w_g = jnp.swapaxes(weight.reshape(groups, c_og, c_in_g), 1, 2)  # (G, Cig, Cog)
        eye = jnp.eye(groups, dtype=weight.dtype)
        w2 = jnp.einsum("gio,gh->giho", w_g, eye).reshape(c_in, c_out)
        kernel = _grouped_matmul_kernel
        flops = 2 * m * c_in * c_out

    x_bytes = jnp.dtype(x.dtype).itemsize
    w_bytes = jnp.dtype(weight.dtype).itemsize
    bytes_accessed = int(
        x_bytes * (m * c_in + m * c_out) + w_bytes * (int(w2.size) + c_out)
    )

    grid_spec = pl.GridSpec(
        grid=grid,
        in_specs=[
            pl.BlockSpec((tm, c_in), lambda i: (i, 0)),
            pl.BlockSpec(w2.shape, lambda i: (0, 0)),      # resident across steps
            pl.BlockSpec((1, c_out), lambda i: (0, 0)),     # resident across steps
        ],
        out_specs=pl.BlockSpec((tm, c_out), lambda i: (i, 0)),
    )

    out = pl.pallas_call(
        kernel,
        out_shape=jax.ShapeDtypeStruct((mp, c_out), x.dtype),
        grid_spec=grid_spec,
        compiler_params=pltpu.CompilerParams(
            dimension_semantics=("parallel",),
        ),
        cost_estimate=pl.CostEstimate(
            flops=flops, transcendentals=0, bytes_accessed=bytes_accessed
        ),
    )(x2, w2, bias2)

    return out[:m].reshape(B, N, c_out)


def _reference(x, weight, bias, groups):
    """Pure-JAX grouped 1x1 conv reference (matches nn.Conv2d(groups=G, k=1))."""
    B, N, c_in = x.shape
    c_out, c_in_g = weight.shape
    c_og = c_out // groups
    xg = x.reshape(B, N, groups, c_in_g)
    wg = weight.reshape(groups, c_og, c_in_g)
    out = jnp.einsum("bngi,goi->bngo", xg, wg).reshape(B, N, c_out)
    return out + bias


if __name__ == "__main__":
    key = jax.random.PRNGKey(0)
    kx, kw, kb, kw2, kb2 = jax.random.split(key, 5)

    # Small shapes consistent with the module: tokens N = P*P, channel projection.
    B, P, C_IN, C_OUT, GROUPS = 2, 4, 32, 32, 4
    N = P * P

    x = jax.random.normal(kx, (B, N, C_IN), dtype=jnp.float32)

    # TODO(synk): nn.Conv2d's default-initialized parameters are not reproduced;
    # weight/bias are taken as explicit inputs here.

    # 1) general grouped projection (groups=4)
    w = jax.random.normal(kw, (C_OUT, C_IN // GROUPS), dtype=jnp.float32) * 0.1
    b = jax.random.normal(kb, (C_OUT,), dtype=jnp.float32) * 0.1
    out = jax.block_until_ready(depthwise_projection_forward(x, w, b, GROUPS))
    ref = _reference(x, w, b, GROUPS)
    assert out.shape == (B, N, C_OUT)
    assert jnp.allclose(out, ref, atol=1e-4, rtol=1e-4)

    # 2) pure depthwise projection (groups == C_in == C_out), the canonical DCA case
    wd = jax.random.normal(kw2, (C_IN, 1), dtype=jnp.float32) * 0.1
    bd = jax.random.normal(kb2, (C_IN,), dtype=jnp.float32) * 0.1
    out_dw = jax.block_until_ready(depthwise_projection_forward(x, wd, bd, C_IN))
    ref_dw = _reference(x, wd, bd, C_IN)
    assert out_dw.shape == (B, N, C_IN)
    assert jnp.allclose(out_dw, ref_dw, atol=1e-4, rtol=1e-4)

    print("KERNEL_OK")
</pallas_src>

<mosaic_0001>
module attributes {stable_mosaic.version = 11 : i64} {
  func.func @_grouped_matmul_kernel(%arg0: i32, %arg1: memref<32x32xf32, #tpu.memory_space<vmem>>, %arg2: memref<32x32xf32, #tpu.memory_space<vmem>>, %arg3: memref<1x32xf32, #tpu.memory_space<vmem>>, %arg4: memref<32x32xf32, #tpu.memory_space<vmem>>) attributes {dimension_semantics = [#tpu.dimension_semantics<parallel>], iteration_bounds = array<i64: 1>, scalar_prefetch = 0 : i64, scratch_operands = 0 : i64, tpu.core_type = #tpu.core_type<tc>, window_params = [{transform_indices = @transform_0, window_bounds = array<i64: 32, 32>}, {pipeline_mode = #tpu.pipeline_mode<synchronous>, transform_indices = @transform_1, window_bounds = array<i64: 32, 32>}, {pipeline_mode = #tpu.pipeline_mode<synchronous>, transform_indices = @transform_2, window_bounds = array<i64: 1, 32>}, {transform_indices = @transform_3, window_bounds = array<i64: 32, 32>}]} {
    %c0 = arith.constant 0 : index
    %c0_0 = arith.constant 0 : index
    %0 = vector.load %arg1[%c0, %c0_0] : memref<32x32xf32, #tpu.memory_space<vmem>>, vector<32x32xf32>
    %c0_1 = arith.constant 0 : index
    %c0_2 = arith.constant 0 : index
    %1 = vector.load %arg2[%c0_1, %c0_2] : memref<32x32xf32, #tpu.memory_space<vmem>>, vector<32x32xf32>
    %cst = arith.constant dense<0.000000e+00> : vector<32x32xf32>
    %2 = tpu.matmul %0, %1, %cst {dimension_numbers = #tpu.dot_dimension_numbers<[1], [0], [0], [1], [0, 0, 1, 1], [], []>} : vector<32x32xf32>, vector<32x32xf32>, vector<32x32xf32> -> vector<32x32xf32>
    %c0_3 = arith.constant 0 : index
    %c0_4 = arith.constant 0 : index
    %3 = vector.load %arg3[%c0_3, %c0_4] : memref<1x32xf32, #tpu.memory_space<vmem>>, vector<1x32xf32>
    %4 = vector.broadcast %3 : vector<1x32xf32> to vector<32x32xf32>
    %5 = arith.addf %2, %4 : vector<32x32xf32>
    %c0_5 = arith.constant 0 : index
    %c0_6 = arith.constant 0 : index
    %6 = vector.load %arg4[%c0_5, %c0_6] : memref<32x32xf32, #tpu.memory_space<vmem>>, vector<32x32xf32>
    tpu.vector_store %arg4[%c0_5, %c0_6], %5 {strides = array<i32>} : memref<32x32xf32, #tpu.memory_space<vmem>>, vector<32x32xf32>,
    return
  }
  func.func @transform_0(%arg0: i32) -> (i32, i32) {
    %c0_i32 = arith.constant 0 : i32
    %c0_i32_0 = arith.constant 0 : i32
    return %arg0, %c0_i32 : i32, i32
  }
  func.func @transform_1(%arg0: i32) -> (i32, i32) {
    %c0_i32 = arith.constant 0 : i32
    %c0_i32_0 = arith.constant 0 : i32
    %c0_i32_1 = arith.constant 0 : i32
    return %c0_i32, %c0_i32_0 : i32, i32
  }
  func.func @transform_2(%arg0: i32) -> (i32, i32) {
    %c0_i32 = arith.constant 0 : i32
    %c0_i32_0 = arith.constant 0 : i32
    %c0_i32_1 = arith.constant 0 : i32
    return %c0_i32, %c0_i32_0 : i32, i32
  }
  func.func @transform_3(%arg0: i32) -> (i32, i32) {
    %c0_i32 = arith.constant 0 : i32
    %c0_i32_0 = arith.constant 0 : i32
    return %arg0, %c0_i32 : i32, i32
  }
}

</mosaic_0001>

<llo_original>
// kernel: tpu_custom_call.1
$region0: #{tpu_custom_call.1}
  #allocation0 [shape = 'u32[]', space=smem, size = 0x4, offset = 0x4, fixed_abs, tag = 'smem constant byte address 0x4 - core index']
  #allocation1 [shape = 'u32[72,128]{1,0:T(1,128)}', space=vmem, size = 0x9000, scoped, tag = 'internal scratch']
  %s0 = inlined_call_operand.hbm [shape: f32[32,32], index: 0, kind: input, shape index: {}]
  %s1 = inlined_call_operand.hbm [shape: f32[32,32], index: 1, kind: input, shape index: {}]
  %s2 = inlined_call_operand.vmem [shape: f32[1,32], index: 2, kind: input, shape index: {}]
  %s3 = inlined_call_operand.hbm [shape: f32[32,32], index: 3, kind: output, shape index: {}]
  %s4 = sld [smem:[#allocation0]]
  $region30: #{tpu_custom_call.1} parent=0
    _
  %s6 = ssub.s32 1, %s4
  %s7 = scalar_select 0, %s6, %s4
  $region1: #{tpu_custom_call.1} parent=0
    #allocation2 [shape = 'u8[16384]{0}', space=vmem, size = 0x4000, scoped, tag = 'input window, operand 0, single buffered']
    #allocation3 [shape = 's32[1]{0}', space=sflag, size = 0x4, scoped, tag = 'scoped memory for tpu_custom_call.1']
    #allocation4 [shape = 's32[1]{0}', space=sflag, size = 0x4, scoped, tag = 'scoped memory for tpu_custom_call.1']
    #allocation5 [shape = 'u8[16384]{0}', space=vmem, size = 0x4000, scoped, tag = 'input window, operand 1, single buffered']
    #allocation6 [shape = 's32[1]{0}', space=sflag, size = 0x4, scoped, tag = 'scoped memory for tpu_custom_call.1']
    #allocation7 [shape = 'u8[16384]{0}', space=vmem, size = 0x4000, scoped, tag = 'output window, operand 0, single buffered']
    %8 = vsyncpa [#allocation3], 0
    %9 = vsyncpa [#allocation6], 0
    %10 = vsyncpa [#allocation4], 0
    // Predicated region
    $region2: #{tpu_custom_call.1} parent=1 // pred_check
      _
    $region3: #{tpu_custom_call.1} parent=1 // pred_check_branch
      %12 = sbr.rel (0) target = $region5
    $region4: #{tpu_custom_call.1} parent=1 // pred_region
      %14 = vsyncadd [#allocation3], 0
      %s15 = sshll.u32 %s0, 4
      %s16 = int_to_ptr.hbm [resolvable:$true] %s15
      %s17 = sshll.u32 [#allocation2], 4
      %s18 = int_to_ptr.vmem [resolvable:$true] %s17
      %23 = dma.hbm_to_vmem [thread:$0]  %s16, 512, %s18, [#allocation3], 128, 128, 8
    $region5: #{tpu_custom_call.1} parent=1 // pred_fallthru
      _
    // Predicated region
    $region6: #{tpu_custom_call.1} parent=1 // pred_check
      _
    $region7: #{tpu_custom_call.1} parent=1 // pred_check_branch
      %25 = sbr.rel (0) target = $region9
    $region8: #{tpu_custom_call.1} parent=1 // pred_region
      %27 = vsyncadd [#allocation6], 0
      %s28 = sshll.u32 %s1, 4
      %s29 = int_to_ptr.hbm [resolvable:$true] %s28
      %s30 = sshll.u32 [#allocation5], 4
      %s31 = int_to_ptr.vmem [resolvable:$true] %s30
      %36 = dma.hbm_to_vmem [thread:$0]  %s29, 512, %s31, [#allocation6], 128, 128, 8
    $region9: #{tpu_custom_call.1} parent=1 // pred_fallthru
      _
    // Predicated region
    $region10: #{tpu_custom_call.1} parent=1 // pred_check
      _
    $region11: #{tpu_custom_call.1} parent=1 // pred_check_branch
      %38 = sbr.rel (0) target = $region13
    $region12: #{tpu_custom_call.1} parent=1 // pred_region
      _
    $region13: #{tpu_custom_call.1} parent=1 // pred_fallthru
      _
    // Predicated region
    $region14: #{tpu_custom_call.1} parent=1 // pred_check
      _
    $region15: #{tpu_custom_call.1} parent=1 // pred_check_branch
      %40 = sbr.rel (0) target = $region17
    $region16: #{tpu_custom_call.1} parent=1 // pred_region
      %42 = dma.done [#allocation3], 512
    $region17: #{tpu_custom_call.1} parent=1 // pred_fallthru
      _
    // Predicated region
    $region18: #{tpu_custom_call.1} parent=1 // pred_check
      _
    $region19: #{tpu_custom_call.1} parent=1 // pred_check_branch
      %44 = sbr.rel (0) target = $region21
    $region20: #{tpu_custom_call.1} parent=1 // pred_region
      %46 = dma.done [#allocation6], 512
    $region21: #{tpu_custom_call.1} parent=1 // pred_fallthru
      _
    %v47 = vld [vmem:[#allocation2] sm:$0xff]
    %v48 = vld [vmem:[#allocation2 + $0x8] sm:$0xff]
    %v49 = vld [vmem:[#allocation2 + $0x10] sm:$0xff]
    %v50 = vld [vmem:[#allocation2 + $0x18] sm:$0xff]
    %v51 = vld [vmem:[#allocation5] sm:$0xff]
    %v52 = vld [vmem:[#allocation5 + $0x8] sm:$0xff]
    %v53 = vld [vmem:[#allocation5 + $0x10] sm:$0xff]
    %v54 = vld [vmem:[#allocation5 + $0x18] sm:$0xff]
    %v55 = vld [vmem:[%s2] sm:$0x1]
    %v57 = vperm.slane %v55, 0
    %vm59 = vcmask 261120
    %v61 = vsel %vm59, %v47, 0
    %v64 = vsel %vm59, %v48, 0
    %v67 = vsel %vm59, %v49, 0
    %v70 = vsel %vm59, %v50, 0
    %72 = vmatpush.msra.mxu0 0.0
    %73 = vmatpush.msra.mxu0 0.0
    %74 = vmatpush.msra.mxu0 0.0
    %75 = vmatpush.msra.mxu0 0.0
    %76 = vmatpush.msra.mxu0 0.0
    %77 = vmatpush.msra.mxu0 0.0
    %78 = vmatpush.msra.mxu0 0.0
    %79 = vmatpush.msra.mxu0 0.0
    %80 = vmatpush.msra.mxu0 0.0
    %81 = vmatpush.msra.mxu0 0.0
    %82 = vmatpush.msra.mxu0 0.0
    %83 = vmatpush.msra.mxu0 0.0
    %84 = vmatpush.msra.mxu0 %v54
    %85 = vmatpush.msra.mxu0 %v53
    %86 = vmatpush.msra.mxu0 %v52
    %87 = vmatpush.msra.mxu0 %v51
    %88 = vmatmul.f32.gmra.mxu0 %v61
    %v89 = vpop.f32.mrf.mxu0
    %v90 = vadd.f32 %v57, %v89
    %91 = vmatmul.f32.gmra.mxu0 %v64
    %v92 = vpop.f32.mrf.mxu0
    %v93 = vadd.f32 %v57, %v92
    %94 = vmatmul.f32.gmra.mxu0 %v67
    %v95 = vpop.f32.mrf.mxu0
    %v96 = vadd.f32 %v57, %v95
    %97 = vmatmul.f32.gmra.mxu0 %v70
    %v98 = vpop.f32.mrf.mxu0
    %v99 = vadd.f32 %v57, %v98
    %100 = vdwg.mxu0
    %101 = vst.msk [vmem:[#allocation7] sm:$0xff] %vm59, %v90
    %102 = vst.msk [vmem:[#allocation7 + $0x8] sm:$0xff] %vm59, %v93
    %103 = vst.msk [vmem:[#allocation7 + $0x10] sm:$0xff] %vm59, %v96
    %104 = vst.msk [vmem:[#allocation7 + $0x18] sm:$0xff] %vm59, %v99
    // Predicated region
    $region22: #{tpu_custom_call.1} parent=1 // pred_check
      _
    $region23: #{tpu_custom_call.1} parent=1 // pred_check_branch
      %106 = sbr.rel (0) target = $region25
    $region24: #{tpu_custom_call.1} parent=1 // pred_region
      %108 = vsyncadd [#allocation4], 0
      %s109 = sshll.u32 [#allocation7], 4
      %s110 = int_to_ptr.vmem [resolvable:$true] %s109
      %s111 = sshll.u32 %s3, 4
      %s112 = int_to_ptr.hbm [resolvable:$true] %s111
      %117 = dma.vmem_to_hbm [thread:$0]  %s110, 512, %s112, [#allocation4], 128, 128, 8
    $region25: #{tpu_custom_call.1} parent=1 // pred_fallthru
      _
    // Predicated region
    $region26: #{tpu_custom_call.1} parent=1 // pred_check
      _
    $region27: #{tpu_custom_call.1} parent=1 // pred_check_branch
      %119 = sbr.rel (0) target = $region29
    $region28: #{tpu_custom_call.1} parent=1 // pred_region
      %121 = dma.done [#allocation4], 512
    $region29: #{tpu_custom_call.1} parent=1 // pred_fallthru
      _
    %122 = vsyncpa [#allocation3], 1
    %123 = vsyncpa [#allocation6], 1
    %124 = vsyncpa [#allocation4], 1

</llo_original>
